<compile_context>
chip_gen: v7x
topology: tpu7x:2x2x1
jax: 0.10.0
libtpu: 0.0.40
codegen_flags: <defaults>
</compile_context>

<pallas_src>
import functools

import jax
import jax.numpy as jnp
from jax import lax
from jax.experimental import pallas as pl
from jax.experimental.pallas import tpu as pltpu


def _focal_loss_kernel(alpha_ref, logits_ref, target_ref, facc_ref, aacc_ref, *,
                       gamma, hw, num_class, tiles_per_split, tile_rows,
                       need_mask):
    """One grid step processes a (C, TS, 128) logits tile of one batch element.

    alpha_ref : (C, 128)     f32 per-class weight broadcast over lanes (resident)
    logits_ref: (C, TS, 128) raw logits; class on the leading non-vreg axis,
                             spatial rows on sublanes, spatial cols on lanes
    target_ref: (TS, 128)    int32 class index per pixel
    facc_ref  : (TS, 128)    f32 running sum of -(1-pt)^gamma * log(pt)
    aacc_ref  : (TS, 128)    f32 running sum of alpha[target]
    Both accumulators stay resident across the innermost ("arbitrary") axis.
    """
    sp = pl.program_id(1)
    st = pl.program_id(2)

    @pl.when(st == 0)
    def _init():
        facc_ref[...] = jnp.zeros_like(facc_ref)
        aacc_ref[...] = jnp.zeros_like(aacc_ref)

    x = logits_ref[...].astype(jnp.float32)            # (C, TS, 128)
    t = target_ref[...]                                # (TS, 128) int32
    ts, lanes = t.shape

    if need_mask:
        # Global flat pixel index of every (row, lane); indices >= hw are
        # pipeline-edge / clamped-tile / wrapper-pad garbage.
        base = (sp * tiles_per_split + st) * tile_rows * lanes
        row = lax.broadcasted_iota(jnp.int32, (ts, lanes), 0)
        col = lax.broadcasted_iota(jnp.int32, (ts, lanes), 1)
        valid = (base + row * lanes + col) < hw        # (TS, 128)
        # Mask BEFORE any transcendental so garbage lanes stay finite.
        x = jnp.where(valid[None], x, 0.0)

    # log-sum-exp over the small leading class axis -> dense (TS,128) vregs.
    m = jnp.max(x, axis=0)                             # (TS, 128)
    se = jnp.sum(jnp.exp(x - m[None]), axis=0)         # (TS, 128)

    # Gather logit-at-target and alpha-at-target with one compare per class
    # (no float one-hot matrix).
    alpha = alpha_ref[...]                             # (C, 128)
    x_t = jnp.zeros_like(m)
    a_sel = jnp.zeros_like(m)
    for cls in range(num_class):
        hit = t == cls
        x_t = jnp.where(hit, x[cls], x_t)
        a_sel = jnp.where(hit, alpha[cls], a_sel)

    # logpt = log softmax(x)[target]; pt = exp(logpt).  (Drops the torch
    # `pt += 1e-10` round trip; only differs in the pt -> 0 tail.)
    logpt = (x_t - m) - jnp.log(se)
    pt = jnp.exp(logpt)

    g = float(gamma)
    one_m_pt = 1.0 - pt
    if g == int(g):
        pow_term = lax.integer_pow(one_m_pt, int(g))
    else:
        # generic real gamma via exp/log (clamped to avoid log(0))
        pow_term = jnp.exp(g * jnp.log(jnp.maximum(one_m_pt, 1e-30)))

    focal = -pow_term * logpt                          # (TS, 128)
    if need_mask:
        focal = jnp.where(valid, focal, 0.0)
        a_sel = jnp.where(valid, a_sel, 0.0)

    facc_ref[...] += focal
    aacc_ref[...] += a_sel


def _vmem_capacity_bytes():
    try:
        info = pltpu.get_tpu_info()
        cap = getattr(info, "vmem_capacity_bytes", None)
        if cap:
            return int(cap)
    except Exception:
        pass
    return 64 * 1024 * 1024     # conservative default (v7x per-core VMEM)


def _choose_tile_rows(num_class, logit_itemsize):
    """Largest sublane-row tile (multiple of 8) whose whole pipeline footprint
    (double-buffered logits + target + two resident f32 accumulators) fits a
    per-generation VMEM budget."""
    cap = _vmem_capacity_bytes()
    budget = min(cap // 3, 40 * 1024 * 1024)
    per_row = 128 * (2 * num_class * logit_itemsize    # logits, double-buffered
                     + 2 * 4                           # int32 target, dbl-buf
                     + 4 * 4)                          # two f32 accumulators
    ts = int(budget // per_row)
    ts = max(8, min(ts, 1 << 15))
    return ts - ts % 8


def _vmem_limit_bytes(num_class, ts, logit_itemsize):
    cap = _vmem_capacity_bytes()
    est = (2 * num_class * ts * 128 * logit_itemsize   # logits double-buffer
           + 2 * ts * 128 * 4                          # target double-buffer
           + 4 * ts * 128 * 4                          # two f32 accumulators
           + num_class * 128 * 4                       # resident alpha
           + (8 << 20))                                # compiler slack
    return int(min(int(cap * 0.85), max(est, 32 << 20)))


def focal_loss(x, target, alpha, *, gamma=2.0, size_average=True,
               tile_rows=None, spatial_splits=None):
    """Pallas focal loss matching PyTorch FocalLoss.forward (smooth=None).

    x      : (N, C, H, W) float logits (NCHW, like PyTorch; bf16 accepted)
    target : (N, H, W)    integer class labels in [0, C)
    alpha  : (C,)         per-class weights (PyTorch default: ones(C))
    """
    n, c, h, w = x.shape
    hw = h * w
    rows = n * hw

    s_rows = pl.cdiv(hw, 128)
    hw_pad = s_rows * 128

    # Free reshapes in the common HW % 128 == 0 case; otherwise one pad copy.
    logits = x.reshape(n, c, hw)
    tgt = target.reshape(n, hw).astype(jnp.int32)
    if hw_pad != hw:
        logits = jnp.pad(logits, ((0, 0), (0, 0), (0, hw_pad - hw)))
        tgt = jnp.pad(tgt, ((0, 0), (0, hw_pad - hw)))
    logits = logits.reshape(n, c, s_rows, 128)
    tgt = tgt.reshape(n, s_rows, 128)

    itemsize = jnp.dtype(x.dtype).itemsize
    if tile_rows is None:
        tile_rows = _choose_tile_rows(c, itemsize)
    ts = min(int(tile_rows), s_rows)
    if ts < s_rows:
        ts = max(8, ts - ts % 8)      # tiled path: multiple-of-8 sublanes
    else:
        ts = s_rows                   # whole spatial axis: full-dim exemption
    n_tiles = pl.cdiv(s_rows, ts)

    # v7x feeds its 2 TensorCores by sharding "parallel" grid axes; when the
    # batch is too small to split, split the spatial tiles instead.
    if spatial_splits is None:
        spatial_splits = 1 if n >= 2 else 2
    p = max(1, min(int(spatial_splits), n_tiles))
    tiles_per_split = pl.cdiv(n_tiles, p)

    covered_rows = p * tiles_per_split * ts
    need_mask = (covered_rows * 128) != hw

    # Per-class weights broadcast across the 128 lanes; resident in VMEM.
    alpha_lanes = jnp.broadcast_to(
        alpha.reshape(-1).astype(jnp.float32)[:, None], (c, 128))

    kernel = functools.partial(
        _focal_loss_kernel, gamma=gamma, hw=hw, num_class=c,
        tiles_per_split=tiles_per_split, tile_rows=ts, need_mask=need_mask)

    def _tile(sp, st):
        # Clamp so ragged splits never produce an out-of-range block index;
        # the kernel masks those steps to zero via the global pixel index.
        return jnp.minimum(sp * tiles_per_split + st, n_tiles - 1)

    facc, aacc = pl.pallas_call(
        kernel,
        out_shape=(jax.ShapeDtypeStruct((n, p, ts, 128), jnp.float32),
                   jax.ShapeDtypeStruct((n, p, ts, 128), jnp.float32)),
        grid_spec=pltpu.PrefetchScalarGridSpec(
            num_scalar_prefetch=0,
            grid=(n, p, tiles_per_split),
            in_specs=[
                # alpha: one tiny resident block
                pl.BlockSpec((c, 128), lambda b, sp, st: (0, 0)),
                # logits tile: class leading, spatial rows x lanes dense
                pl.BlockSpec((None, c, ts, 128),
                             lambda b, sp, st: (b, 0, _tile(sp, st), 0)),
                # target tile
                pl.BlockSpec((None, ts, 128),
                             lambda b, sp, st: (b, _tile(sp, st), 0)),
            ],
            # per-(batch, split) dense accumulators, resident across tiles
            out_specs=[
                pl.BlockSpec((None, None, ts, 128),
                             lambda b, sp, st: (b, sp, 0, 0)),
                pl.BlockSpec((None, None, ts, 128),
                             lambda b, sp, st: (b, sp, 0, 0)),
            ],
        ),
        compiler_params=pltpu.CompilerParams(
            dimension_semantics=("parallel", "parallel", "arbitrary"),
            vmem_limit_bytes=_vmem_limit_bytes(c, ts, itemsize)),
    )(alpha_lanes, logits, tgt)

    sum_f = jnp.sum(facc)
    sum_a = jnp.sum(aacc)

    # Reproduce PyTorch broadcasting: alpha[idx] is (R,1,1), focal term is (R,)
    # -> loss tensor is (R,1,R); mean == mean(a)*mean(f), sum == sum(a)*sum(f).
    if size_average:
        return (sum_a / rows) * (sum_f / rows)
    return sum_a * sum_f


def _focal_loss_ref(x, target, alpha, gamma=2.0, size_average=True):
    """Pure-JAX reference mirroring the PyTorch module exactly."""
    n, c, h, w = x.shape
    logit = jax.nn.softmax(x.astype(jnp.float32), axis=1)
    logit = jnp.transpose(logit.reshape(n, c, h * w), (0, 2, 1)).reshape(-1, c)
    t = target.reshape(-1).astype(jnp.int32)
    one_hot = jax.nn.one_hot(t, c, dtype=jnp.float32)
    pt = jnp.sum(one_hot * logit, axis=1) + 1e-10            # (R,)
    logpt = jnp.log(pt)
    focal = -jnp.power(1.0 - pt, gamma) * logpt              # (R,)
    a_sel = alpha.reshape(-1).astype(jnp.float32)[t]         # (R,)
    # broadcast (R,1,1)*(R,) -> (R,1,R)
    if size_average:
        return jnp.mean(a_sel) * jnp.mean(focal)
    return jnp.sum(a_sel) * jnp.sum(focal)


if __name__ == "__main__":
    key = jax.random.PRNGKey(0)
    k1, k2, k3, k4, k5, k6 = jax.random.split(key, 6)

    # Case 1: canonical small NCHW problem (HW % 128 == 0, default alpha).
    x1 = jax.random.normal(k1, (2, 4, 16, 16), dtype=jnp.float32)
    t1 = jax.random.randint(k2, (2, 16, 16), 0, 4, dtype=jnp.int32)
    a1 = jnp.ones((4,), dtype=jnp.float32)       # FocalLoss default alpha
    out1 = jax.block_until_ready(focal_loss(x1, t1, a1, gamma=2.0))
    ref1 = _focal_loss_ref(x1, t1, a1, gamma=2.0)
    assert jnp.allclose(out1, ref1, rtol=1e-5, atol=1e-6), (out1, ref1)

    # Case 2: ragged spatial extent (HW % 128 != 0), normalized list-style
    # alpha, non-integer gamma -> padded/masked path.
    x2 = jax.random.normal(k3, (1, 5, 20, 20), dtype=jnp.float32)
    t2 = jax.random.randint(k4, (1, 20, 20), 0, 5, dtype=jnp.int32)
    a2 = jnp.array([1.0, 2.0, 3.0, 2.5, 1.5], dtype=jnp.float32)
    a2 = a2 / a2.sum()
    out2 = jax.block_until_ready(focal_loss(x2, t2, a2, gamma=1.5))
    ref2 = _focal_loss_ref(x2, t2, a2, gamma=1.5)
    assert jnp.allclose(out2, ref2, rtol=1e-5, atol=1e-6), (out2, ref2)

    # Case 3: batch of one with an explicit spatial split and small tile so the
    # multi-tile / clamped-edge / parallel-split path is exercised.
    x3 = jax.random.normal(k5, (1, 4, 48, 48), dtype=jnp.float32)
    t3 = jax.random.randint(k6, (1, 48, 48), 0, 4, dtype=jnp.int32)
    a3 = jnp.ones((4,), dtype=jnp.float32)
    out3 = jax.block_until_ready(
        focal_loss(x3, t3, a3, gamma=2.0, size_average=False,
                   tile_rows=8, spatial_splits=2))
    ref3 = _focal_loss_ref(x3, t3, a3, gamma=2.0, size_average=False)
    assert jnp.allclose(out3, ref3, rtol=1e-4, atol=1e-4), (out3, ref3)

    print("KERNEL_OK")
</pallas_src>

<mosaic_0001>
module attributes {stable_mosaic.version = 11 : i64} {
  func.func @_focal_loss_kernel(%arg0: i32, %arg1: i32, %arg2: i32, %arg3: memref<4x128xf32, #tpu.memory_space<vmem>>, %arg4: memref<1x4x2x128xf32, #tpu.memory_space<vmem>>, %arg5: memref<1x2x128xi32, #tpu.memory_space<vmem>>, %arg6: memref<1x1x2x128xf32, #tpu.memory_space<vmem>>, %arg7: memref<1x1x2x128xf32, #tpu.memory_space<vmem>>) attributes {dimension_semantics = [#tpu.dimension_semantics<parallel>, #tpu.dimension_semantics<parallel>, #tpu.dimension_semantics<arbitrary>], iteration_bounds = array<i64: 2, 1, 1>, scalar_prefetch = 0 : i64, scratch_operands = 0 : i64, tpu.core_type = #tpu.core_type<tc>, window_params = [{pipeline_mode = #tpu.pipeline_mode<synchronous>, transform_indices = @transform_0, window_bounds = array<i64: 4, 128>}, {transform_indices = @transform_1, window_bounds = array<i64: 1, 4, 2, 128>}, {transform_indices = @transform_2, window_bounds = array<i64: 1, 2, 128>}, {transform_indices = @transform_3, window_bounds = array<i64: 1, 1, 2, 128>}, {transform_indices = @transform_4, window_bounds = array<i64: 1, 1, 2, 128>}]} {
    %c0_i32 = arith.constant 0 : i32
    %0 = arith.cmpi eq, %arg2, %c0_i32 : i32
    %1 = arith.extui %0 : i1 to i32
    %c0_i32_0 = arith.constant 0 : i32
    %2 = arith.cmpi ne, %1, %c0_i32_0 : i32
    scf.if %2 {
      %cst_31 = arith.constant 0.000000e+00 : f32
      %78 = vector.broadcast %cst_31 : f32 to vector<2x128xf32>
      %c0_32 = arith.constant 0 : index
      %c0_33 = arith.constant 0 : index
      %c0_34 = arith.constant 0 : index
      %c0_35 = arith.constant 0 : index
      %79 = vector.load %arg6[%c0_32, %c0_33, %c0_34, %c0_35] : memref<1x1x2x128xf32, #tpu.memory_space<vmem>>, vector<1x1x2x128xf32>
      %80 = vector.shape_cast %79 : vector<1x1x2x128xf32> to vector<2x128xf32>
      %81 = vector.shape_cast %78 : vector<2x128xf32> to vector<1x1x2x128xf32>
      tpu.vector_store %arg6[%c0_32, %c0_33, %c0_34, %c0_35], %81 {strides = array<i32>} : memref<1x1x2x128xf32, #tpu.memory_space<vmem>>, vector<1x1x2x128xf32>,
      %cst_36 = arith.constant 0.000000e+00 : f32
      %82 = vector.broadcast %cst_36 : f32 to vector<2x128xf32>
      %c0_37 = arith.constant 0 : index
      %c0_38 = arith.constant 0 : index
      %c0_39 = arith.constant 0 : index
      %c0_40 = arith.constant 0 : index
      %83 = vector.load %arg7[%c0_37, %c0_38, %c0_39, %c0_40] : memref<1x1x2x128xf32, #tpu.memory_space<vmem>>, vector<1x1x2x128xf32>
      %84 = vector.shape_cast %83 : vector<1x1x2x128xf32> to vector<2x128xf32>
      %85 = vector.shape_cast %82 : vector<2x128xf32> to vector<1x1x2x128xf32>
      tpu.vector_store %arg7[%c0_37, %c0_38, %c0_39, %c0_40], %85 {strides = array<i32>} : memref<1x1x2x128xf32, #tpu.memory_space<vmem>>, vector<1x1x2x128xf32>,
    } else {
    }
    %c0 = arith.constant 0 : index
    %c0_1 = arith.constant 0 : index
    %c0_2 = arith.constant 0 : index
    %c0_3 = arith.constant 0 : index
    %3 = vector.load %arg4[%c0, %c0_1, %c0_2, %c0_3] : memref<1x4x2x128xf32, #tpu.memory_space<vmem>>, vector<1x4x2x128xf32>
    %4 = vector.shape_cast %3 : vector<1x4x2x128xf32> to vector<4x2x128xf32>
    %c0_4 = arith.constant 0 : index
    %c0_5 = arith.constant 0 : index
    %c0_6 = arith.constant 0 : index
    %5 = vector.load %arg5[%c0_4, %c0_5, %c0_6] : memref<1x2x128xi32, #tpu.memory_space<vmem>>, vector<1x2x128xi32>
    %6 = vector.shape_cast %5 : vector<1x2x128xi32> to vector<2x128xi32>
    %cst = arith.constant dense<0xFF800000> : vector<2x128xf32>
    %7 = vector.multi_reduction <maximumf>, %4, %cst [0] : vector<4x2x128xf32> to vector<2x128xf32>
    %8 = vector.shape_cast %7 : vector<2x128xf32> to vector<1x2x128xf32>
    %9 = vector.broadcast %8 : vector<1x2x128xf32> to vector<4x2x128xf32>
    %10 = arith.subf %4, %9 : vector<4x2x128xf32>
    %11 = math.exp %10 : vector<4x2x128xf32>
    %cst_7 = arith.constant dense<0.000000e+00> : vector<2x128xf32>
    %12 = vector.multi_reduction <add>, %11, %cst_7 [0] : vector<4x2x128xf32> to vector<2x128xf32>
    %c0_8 = arith.constant 0 : index
    %c0_9 = arith.constant 0 : index
    %13 = vector.load %arg3[%c0_8, %c0_9] : memref<4x128xf32, #tpu.memory_space<vmem>>, vector<4x128xf32>
    %cst_10 = arith.constant 0.000000e+00 : f32
    %14 = vector.broadcast %cst_10 : f32 to vector<2x128xf32>
    %cst_11 = arith.constant 0.000000e+00 : f32
    %15 = vector.broadcast %cst_11 : f32 to vector<2x128xf32>
    %c0_i32_12 = arith.constant 0 : i32
    %16 = vector.broadcast %c0_i32_12 : i32 to vector<2x128xi32>
    %17 = arith.cmpi eq, %6, %16 : vector<2x128xi32>
    %18 = vector.extract_strided_slice %4 {offsets = [0, 0, 0], sizes = [1, 2, 128], strides = [1, 1, 1]} : vector<4x2x128xf32> to vector<1x2x128xf32>
    %19 = vector.shape_cast %18 : vector<1x2x128xf32> to vector<2x128xf32>
    %20 = arith.select %17, %19, %14 : vector<2x128xi1>, vector<2x128xf32>
    %21 = vector.extract_strided_slice %13 {offsets = [0, 0], sizes = [1, 128], strides = [1, 1]} : vector<4x128xf32> to vector<1x128xf32>
    %22 = vector.shape_cast %21 : vector<1x128xf32> to vector<128xf32>
    %23 = vector.shape_cast %22 : vector<128xf32> to vector<1x128xf32>
    %24 = vector.broadcast %23 : vector<1x128xf32> to vector<2x128xf32>
    %25 = arith.select %17, %24, %15 : vector<2x128xi1>, vector<2x128xf32>
    %c1_i32 = arith.constant 1 : i32
    %26 = vector.broadcast %c1_i32 : i32 to vector<2x128xi32>
    %27 = arith.cmpi eq, %6, %26 : vector<2x128xi32>
    %28 = vector.extract_strided_slice %4 {offsets = [1, 0, 0], sizes = [1, 2, 128], strides = [1, 1, 1]} : vector<4x2x128xf32> to vector<1x2x128xf32>
    %29 = vector.shape_cast %28 : vector<1x2x128xf32> to vector<2x128xf32>
    %30 = arith.select %27, %29, %20 : vector<2x128xi1>, vector<2x128xf32>
    %31 = vector.extract_strided_slice %13 {offsets = [1, 0], sizes = [1, 128], strides = [1, 1]} : vector<4x128xf32> to vector<1x128xf32>
    %32 = vector.shape_cast %31 : vector<1x128xf32> to vector<128xf32>
    %33 = vector.shape_cast %32 : vector<128xf32> to vector<1x128xf32>
    %34 = vector.broadcast %33 : vector<1x128xf32> to vector<2x128xf32>
    %35 = arith.select %27, %34, %25 : vector<2x128xi1>, vector<2x128xf32>
    %c2_i32 = arith.constant 2 : i32
    %36 = vector.broadcast %c2_i32 : i32 to vector<2x128xi32>
    %37 = arith.cmpi eq, %6, %36 : vector<2x128xi32>
    %38 = vector.extract_strided_slice %4 {offsets = [2, 0, 0], sizes = [1, 2, 128], strides = [1, 1, 1]} : vector<4x2x128xf32> to vector<1x2x128xf32>
    %39 = vector.shape_cast %38 : vector<1x2x128xf32> to vector<2x128xf32>
    %40 = arith.select %37, %39, %30 : vector<2x128xi1>, vector<2x128xf32>
    %41 = vector.extract_strided_slice %13 {offsets = [2, 0], sizes = [1, 128], strides = [1, 1]} : vector<4x128xf32> to vector<1x128xf32>
    %42 = vector.shape_cast %41 : vector<1x128xf32> to vector<128xf32>
    %43 = vector.shape_cast %42 : vector<128xf32> to vector<1x128xf32>
    %44 = vector.broadcast %43 : vector<1x128xf32> to vector<2x128xf32>
    %45 = arith.select %37, %44, %35 : vector<2x128xi1>, vector<2x128xf32>
    %c3_i32 = arith.constant 3 : i32
    %46 = vector.broadcast %c3_i32 : i32 to vector<2x128xi32>
    %47 = arith.cmpi eq, %6, %46 : vector<2x128xi32>
    %48 = vector.extract_strided_slice %4 {offsets = [3, 0, 0], sizes = [1, 2, 128], strides = [1, 1, 1]} : vector<4x2x128xf32> to vector<1x2x128xf32>
    %49 = vector.shape_cast %48 : vector<1x2x128xf32> to vector<2x128xf32>
    %50 = arith.select %47, %49, %40 : vector<2x128xi1>, vector<2x128xf32>
    %51 = vector.extract_strided_slice %13 {offsets = [3, 0], sizes = [1, 128], strides = [1, 1]} : vector<4x128xf32> to vector<1x128xf32>
    %52 = vector.shape_cast %51 : vector<1x128xf32> to vector<128xf32>
    %53 = vector.shape_cast %52 : vector<128xf32> to vector<1x128xf32>
    %54 = vector.broadcast %53 : vector<1x128xf32> to vector<2x128xf32>
    %55 = arith.select %47, %54, %45 : vector<2x128xi1>, vector<2x128xf32>
    %56 = arith.subf %50, %7 : vector<2x128xf32>
    %57 = math.log %12 : vector<2x128xf32>
    %58 = arith.subf %56, %57 : vector<2x128xf32>
    %59 = math.exp %58 : vector<2x128xf32>
    %cst_13 = arith.constant 1.000000e+00 : f32
    %60 = vector.broadcast %cst_13 : f32 to vector<2x128xf32>
    %61 = arith.subf %60, %59 : vector<2x128xf32>
    %62 = arith.mulf %61, %61 : vector<2x128xf32>
    %cst_14 = arith.constant 0.000000e+00 : f32
    %63 = vector.broadcast %cst_14 : f32 to vector<2x128xf32>
    %64 = arith.subf %63, %62 : vector<2x128xf32>
    %65 = arith.mulf %64, %58 : vector<2x128xf32>
    %c0_15 = arith.constant 0 : index
    %c0_16 = arith.constant 0 : index
    %c0_17 = arith.constant 0 : index
    %c0_18 = arith.constant 0 : index
    %66 = vector.load %arg6[%c0_15, %c0_16, %c0_17, %c0_18] : memref<1x1x2x128xf32, #tpu.memory_space<vmem>>, vector<1x1x2x128xf32>
    %67 = vector.shape_cast %66 : vector<1x1x2x128xf32> to vector<2x128xf32>
    %68 = arith.addf %67, %65 : vector<2x128xf32>
    %c0_19 = arith.constant 0 : index
    %c0_20 = arith.constant 0 : index
    %c0_21 = arith.constant 0 : index
    %c0_22 = arith.constant 0 : index
    %69 = vector.load %arg6[%c0_19, %c0_20, %c0_21, %c0_22] : memref<1x1x2x128xf32, #tpu.memory_space<vmem>>, vector<1x1x2x128xf32>
    %70 = vector.shape_cast %69 : vector<1x1x2x128xf32> to vector<2x128xf32>
    %71 = vector.shape_cast %68 : vector<2x128xf32> to vector<1x1x2x128xf32>
    tpu.vector_store %arg6[%c0_19, %c0_20, %c0_21, %c0_22], %71 {strides = array<i32>} : memref<1x1x2x128xf32, #tpu.memory_space<vmem>>, vector<1x1x2x128xf32>,
    %c0_23 = arith.constant 0 : index
    %c0_24 = arith.constant 0 : index
    %c0_25 = arith.constant 0 : index
    %c0_26 = arith.constant 0 : index
    %72 = vector.load %arg7[%c0_23, %c0_24, %c0_25, %c0_26] : memref<1x1x2x128xf32, #tpu.memory_space<vmem>>, vector<1x1x2x128xf32>
    %73 = vector.shape_cast %72 : vector<1x1x2x128xf32> to vector<2x128xf32>
    %74 = arith.addf %73, %55 : vector<2x128xf32>
    %c0_27 = arith.constant 0 : index
    %c0_28 = arith.constant 0 : index
    %c0_29 = arith.constant 0 : index
    %c0_30 = arith.constant 0 : index
    %75 = vector.load %arg7[%c0_27, %c0_28, %c0_29, %c0_30] : memref<1x1x2x128xf32, #tpu.memory_space<vmem>>, vector<1x1x2x128xf32>
    %76 = vector.shape_cast %75 : vector<1x1x2x128xf32> to vector<2x128xf32>
    %77 = vector.shape_cast %74 : vector<2x128xf32> to vector<1x1x2x128xf32>
    tpu.vector_store %arg7[%c0_27, %c0_28, %c0_29, %c0_30], %77 {strides = array<i32>} : memref<1x1x2x128xf32, #tpu.memory_space<vmem>>, vector<1x1x2x128xf32>,
    return
  }
  func.func @transform_0(%arg0: i32, %arg1: i32, %arg2: i32) -> (i32, i32) {
    %c0_i32 = arith.constant 0 : i32
    %c0_i32_0 = arith.constant 0 : i32
    %c0_i32_1 = arith.constant 0 : i32
    return %c0_i32, %c0_i32_0 : i32, i32
  }
  func.func @transform_1(%arg0: i32, %arg1: i32, %arg2: i32) -> (i32, i32, i32, i32) {
    %c1_i32 = arith.constant 1 : i32
    %0 = arith.muli %arg1, %c1_i32 : i32
    %1 = arith.addi %0, %arg2 : i32
    %c0_i32 = arith.constant 0 : i32
    %2 = arith.minsi %1, %c0_i32 : i32
    %c0_i32_0 = arith.constant 0 : i32
    %c0_i32_1 = arith.constant 0 : i32
    %c0_i32_2 = arith.constant 0 : i32
    return %arg0, %c0_i32_0, %2, %c0_i32_1 : i32, i32, i32, i32
  }
  func.func @transform_2(%arg0: i32, %arg1: i32, %arg2: i32) -> (i32, i32, i32) {
    %c1_i32 = arith.constant 1 : i32
    %0 = arith.muli %arg1, %c1_i32 : i32
    %1 = arith.addi %0, %arg2 : i32
    %c0_i32 = arith.constant 0 : i32
    %2 = arith.minsi %1, %c0_i32 : i32
    %c0_i32_0 = arith.constant 0 : i32
    %c0_i32_1 = arith.constant 0 : i32
    return %arg0, %2, %c0_i32_0 : i32, i32, i32
  }
  func.func @transform_3(%arg0: i32, %arg1: i32, %arg2: i32) -> (i32, i32, i32, i32) {
    %c0_i32 = arith.constant 0 : i32
    %c0_i32_0 = arith.constant 0 : i32
    %c0_i32_1 = arith.constant 0 : i32
    return %arg0, %arg1, %c0_i32, %c0_i32_0 : i32, i32, i32, i32
  }
  func.func @transform_4(%arg0: i32, %arg1: i32, %arg2: i32) -> (i32, i32, i32, i32) {
    %c0_i32 = arith.constant 0 : i32
    %c0_i32_0 = arith.constant 0 : i32
    %c0_i32_1 = arith.constant 0 : i32
    return %arg0, %arg1, %c0_i32, %c0_i32_0 : i32, i32, i32, i32
  }
}

</mosaic_0001>

<llo_original>
// kernel: tpu_custom_call.1
$region0: #{tpu_custom_call.1}
  #allocation0 [shape = 'u32[]', space=smem, size = 0x4, offset = 0x4, fixed_abs, tag = 'smem constant byte address 0x4 - core index']
  #allocation1 [shape = 'u32[144,128]{1,0:T(1,128)}', space=vmem, size = 0x12000, scoped, tag = 'internal scratch']
  %s0 = inlined_call_operand.hbm [shape: f32[4,128], index: 0, kind: input, shape index: {}]
  %s1 = inlined_call_operand.hbm [shape: f32[2,4,2,128], index: 1, kind: input, shape index: {}]
  %s2 = inlined_call_operand.vmem [shape: s32[2,2,128], index: 2, kind: input, shape index: {}]
  %s3 = inlined_call_operand.hbm [shape: f32[2,1,2,128], index: 3, kind: output, shape index: {0}]
  %s4 = inlined_call_operand.hbm [shape: f32[2,1,2,128], index: 4, kind: output, shape index: {1}]
  %5 = xla_tuple %s3, %s4
  %s6 = sld [smem:[#allocation0]]
  $region65: #{tpu_custom_call.1} parent=0
    _
  %s8 = ssub.s32 1, %s6
  %s9 = scalar_select 0, %s8, %s6
  $region1: #{tpu_custom_call.1} parent=0
    #allocation2 [shape = 'u8[2048]{0}', space=vmem, size = 0x800, scoped, tag = 'input window, operand 0, single buffered']
    #allocation3 [shape = 's32[2]{0}', space=sflag, size = 0x8, scoped, tag = 'scoped memory for tpu_custom_call.1']
    #allocation4 [shape = 's32[2]{0}', space=sflag, size = 0x8, scoped, tag = 'scoped memory for tpu_custom_call.1']
    #allocation5 [shape = 'u8[8192]{0}', space=vmem, size = 0x2000, scoped, tag = 'input window, operand 1']
    #allocation6 [shape = 's32[2]{0}', space=sflag, size = 0x8, scoped, tag = 'scoped memory for tpu_custom_call.1']
    #allocation7 [shape = 'u8[2048]{0}', space=vmem, size = 0x800, scoped, tag = 'output window, operand 0']
    #allocation8 [shape = 'u8[2048]{0}', space=vmem, size = 0x800, scoped, tag = 'output window, operand 1']
    #allocation9 [shape = 's32[2]{0}', space=sflag, size = 0x8, scoped, tag = 'scoped memory for tpu_custom_call.1']
    %10 = vsyncpa [#allocation3], 0
    %11 = vsyncpa [#allocation6], 0
    %s12 = scalar_lea.sflag [#allocation6], 1
    %13 = vsyncpa %s12, 0
    %14 = vsyncpa [#allocation4], 0
    %s15 = scalar_lea.sflag [#allocation4], 1
    %16 = vsyncpa %s15, 0
    %17 = vsyncpa [#allocation9], 0
    %s18 = scalar_lea.sflag [#allocation9], 1
    %19 = vsyncpa %s18, 0
    loop: start=0, step=1, limit=4
    $region2: #{tpu_custom_call.1} parent=1 // loop_pre_header
      _
    $region3: #{tpu_custom_call.1} parent=1 // loop_header
      %s21 = sphi 0, %s25
      %p22 = scmp.ge.s32.totalorder %s21, 4
      %s28 = sphi 0, %s47
      %s29 = sphi 0, %s43
      %s30 = sphi 0, %s39
      %s31 = sphi 0, %s28
      %s32 = sphi 0, %s29
      %s33 = sphi 0, %s30
      %s34 = sphi 0, %s31
      %s35 = sphi 0, %s32
      %s36 = sphi 0, %s33
      %s48 = sphi 0, %s48
      %s50 = sphi 0, %s48
      %s51 = sphi 0, %s50
      %s65 = sphi 0, %s51
      %s79 = sphi 0, %s81
      %s82 = sphi 0, %s79
      %s83 = sphi 0, %s82
      %s99 = sphi 0, %s83
      %s113 = sphi 0, %s115
      %s116 = sphi 0, %s113
      %s117 = sphi 0, %s116
      %s133 = sphi 0, %s117
      %s141 = sphi 0, %s143
      %s144 = sphi 0, %s141
      %s145 = sphi 0, %s144
      %s161 = sphi 0, %s145
      %s169 = sphi 0, %s171
      %s172 = sphi 0, %s169
      %s173 = sphi 0, %s172
      %s189 = sphi 0, %s173
    $region4: #{tpu_custom_call.1} parent=1 // loop_header_branch
      %24 = sbr.rel (%p22) target = $region8
    $region5: #{tpu_custom_call.1} parent=1 // loop_body
      %s26 = ssub.s32 %s21, 1
      %s27 = ssub.s32 %s21, 2
      %s37 = sadd.s32 1, %s30
      %p38 = scmp.ge.s32.totalorder %s37, 1
      %s39 = scalar_select %p38, 0, %s37
      %s40 = sadd.s32 1, %s29
      %s41 = scalar_select %p38, %s40, %s29
      %p42 = scmp.ge.s32.totalorder %s41, 1
      %s43 = scalar_select %p42, 0, %s41
      %s44 = sadd.s32 1, %s28
      %s45 = scalar_select %p42, %s44, %s28
      %p46 = scmp.ge.s32.totalorder %s45, 2
      %s47 = scalar_select %p46, 0, %s45
      %s49 = sadd.s32 %s48, 1
      %p52 = scmp.eq.s32.totalorder %s21, 1
      %p53 = scmp.ne.s32.totalorder %s48, %s50
      %p54 = scmp.eq.s32.totalorder %s21, 0
      %p55 = por %p53, %p54
      %p56 = scmp.ne.s32.totalorder %s48, %s50
      %p57 = scmp.eq.s32.totalorder %s26, 1
      %p58 = por %p56, %p57
      %p59 = scmp.ne.s32.totalorder %s50, %s51
      %p60 = scmp.eq.s32.totalorder %s26, 0
      %p61 = por %p59, %p60
      %p62 = scmp.ne.s32.totalorder %s50, %s51
      %p63 = scmp.eq.s32.totalorder %s27, 1
      %p64 = por %p62, %p63
      %p66 = scmp.ne.s32.totalorder %s51, %s65
      %p67 = scmp.eq.s32.totalorder %s27, 0
      %p68 = por %p66, %p67
      %s69 = sadd.s32 %s29, %s30
      %p70 = scmp.lt.s32.totalorder %s69, 0
      %s71 = scalar_select %p70, %s69, 0
      %s72 = sadd.s32 %s43, %s39
      %p73 = scmp.lt.s32.totalorder %s72, 0
      %s74 = scalar_select %p73, %s72, 0
      %s75 = ssub.s32 %s28, %s47
      %s76 = ssub.s32 %s71, %s74
      %s77 = sor.u32 %s75, %s76
      %p78 = scmp.eq.s32.totalorder %s77, 0
      %s80 = sadd.s32 %s79, 1
      %s81 = scalar_select %p78, %s79, %s80
      %p84 = pneg %p78
      %p85 = scmp.eq.s32.totalorder %s21, 1
      %p86 = por %p84, %p85
      %p87 = scmp.ne.s32.totalorder %s79, %s82
      %p88 = scmp.eq.s32.totalorder %s21, 0
      %p89 = por %p87, %p88
      %p90 = scmp.ne.s32.totalorder %s79, %s82
      %p91 = scmp.eq.s32.totalorder %s26, 1
      %p92 = por %p90, %p91
      %p93 = scmp.ne.s32.totalorder %s82, %s83
      %p94 = scmp.eq.s32.totalorder %s26, 0
      %p95 = por %p93, %p94
      %p96 = scmp.ne.s32.totalorder %s82, %s83
      %p97 = scmp.eq.s32.totalorder %s27, 1
      %p98 = por %p96, %p97
      %p100 = scmp.ne.s32.totalorder %s83, %s99
      %p101 = scmp.eq.s32.totalorder %s27, 0
      %p102 = por %p100, %p101
      %s103 = sadd.s32 %s29, %s30
      %p104 = scmp.lt.s32.totalorder %s103, 0
      %s105 = scalar_select %p104, %s103, 0
      %s106 = sadd.s32 %s43, %s39
      %p107 = scmp.lt.s32.totalorder %s106, 0
      %s108 = scalar_select %p107, %s106, 0
      %s109 = ssub.s32 %s28, %s47
      %s110 = ssub.s32 %s105, %s108
      %s111 = sor.u32 %s109, %s110
      %p112 = scmp.eq.s32.totalorder %s111, 0
      %s114 = sadd.s32 %s113, 1
      %s115 = scalar_select %p112, %s113, %s114
      %p118 = pneg %p112
      %p119 = scmp.eq.s32.totalorder %s21, 1
      %p120 = por %p118, %p119
      %p121 = scmp.ne.s32.totalorder %s113, %s116
      %p122 = scmp.eq.s32.totalorder %s21, 0
      %p123 = por %p121, %p122
      %p124 = scmp.ne.s32.totalorder %s113, %s116
      %p125 = scmp.eq.s32.totalorder %s26, 1
      %p126 = por %p124, %p125
      %p127 = scmp.ne.s32.totalorder %s116, %s117
      %p128 = scmp.eq.s32.totalorder %s26, 0
      %p129 = por %p127, %p128
      %p130 = scmp.ne.s32.totalorder %s116, %s117
      %p131 = scmp.eq.s32.totalorder %s27, 1
      %p132 = por %p130, %p131
      %p134 = scmp.ne.s32.totalorder %s117, %s133
      %p135 = scmp.eq.s32.totalorder %s27, 0
      %p136 = por %p134, %p135
      %s137 = ssub.s32 %s28, %s47
      %s138 = ssub.s32 %s29, %s43
      %s139 = sor.u32 %s137, %s138
      %p140 = scmp.eq.s32.totalorder %s139, 0
      %s142 = sadd.s32 %s141, 1
      %s143 = scalar_select %p140, %s141, %s142
      %p146 = pneg %p140
      %p147 = scmp.eq.s32.totalorder %s21, 1
      %p148 = por %p146, %p147
      %p149 = scmp.ne.s32.totalorder %s141, %s144
      %p150 = scmp.eq.s32.totalorder %s21, 0
      %p151 = por %p149, %p150
      %p152 = scmp.ne.s32.totalorder %s141, %s144
      %p153 = scmp.eq.s32.totalorder %s26, 1
      %p154 = por %p152, %p153
      %p155 = scmp.ne.s32.totalorder %s144, %s145
      %p156 = scmp.eq.s32.totalorder %s26, 0
      %p157 = por %p155, %p156
      %p158 = scmp.ne.s32.totalorder %s144, %s145
      %p159 = scmp.eq.s32.totalorder %s27, 1
      %p160 = por %p158, %p159
      %p162 = scmp.ne.s32.totalorder %s145, %s161
      %p163 = scmp.eq.s32.totalorder %s27, 0
      %p164 = por %p162, %p163
      %s165 = ssub.s32 %s28, %s47
      %s166 = ssub.s32 %s29, %s43
      %s167 = sor.u32 %s165, %s166
      %p168 = scmp.eq.s32.totalorder %s167, 0
      %s170 = sadd.s32 %s169, 1
      %s171 = scalar_select %p168, %s169, %s170
      %p174 = pneg %p168
      %p175 = scmp.eq.s32.totalorder %s21, 1
      %p176 = por %p174, %p175
      %p177 = scmp.ne.s32.totalorder %s169, %s172
      %p178 = scmp.eq.s32.totalorder %s21, 0
      %p179 = por %p177, %p178
      %p180 = scmp.ne.s32.totalorder %s169, %s172
      %p181 = scmp.eq.s32.totalorder %s26, 1
      %p182 = por %p180, %p181
      %p183 = scmp.ne.s32.totalorder %s172, %s173
      %p184 = scmp.eq.s32.totalorder %s26, 0
      %p185 = por %p183, %p184
      %p186 = scmp.ne.s32.totalorder %s172, %s173
      %p187 = scmp.eq.s32.totalorder %s27, 1
      %p188 = por %p186, %p187
      %p190 = scmp.ne.s32.totalorder %s173, %s189
      %p191 = scmp.eq.s32.totalorder %s27, 0
      %p192 = por %p190, %p191
      %p193 = scmp.le.s32.totalorder 1, %s21
      %p194 = scmp.lt.s32.totalorder %s21, 3
      %p195 = pnand %p193, %p194
      %p196 = pneg %p195
      // Predicated region
      $region9: #{tpu_custom_call.1} parent=5 // pred_check
        _
      $region10: #{tpu_custom_call.1} parent=5 // pred_check_branch
        %198 = sbr.rel (%p195) target = $region12
      $region11: #{tpu_custom_call.1} parent=5 // pred_region
        %s199 = ssub.s32 %s21, 1
        // Predicated region
        $region13: #{tpu_custom_call.1} parent=11 // pred_check
          %p200 = pneg %p61
        $region14: #{tpu_custom_call.1} parent=11 // pred_check_branch
          %202 = sbr.rel (%p200) target = $region16
        $region15: #{tpu_custom_call.1} parent=11 // pred_region
          %s204 = ssub.s32 64, 64
          %205 = vsyncadd [#allocation3], %s204
          %s207 = sshll.u32 [#allocation2], 4
          %s208 = int_to_ptr.vmem [resolvable:$true] %s207
          %210 = dma.hbm_to_vmem [thread:$0]  %s0, 64, %s208, [#allocation3]
        $region16: #{tpu_custom_call.1} parent=11 // pred_fallthru
          _
      $region12: #{tpu_custom_call.1} parent=5 // pred_fallthru
        _
      %p211 = scmp.lt.s32.totalorder %s21, 2
      // Predicated region
      $region17: #{tpu_custom_call.1} parent=5 // pred_check
        %p212 = pneg %p211
      $region18: #{tpu_custom_call.1} parent=5 // pred_check_branch
        %214 = sbr.rel (%p212) target = $region20
      $region19: #{tpu_custom_call.1} parent=5 // pred_region
        // Predicated region
        $region21: #{tpu_custom_call.1} parent=19 // pred_check
          %p215 = pneg %p89
        $region22: #{tpu_custom_call.1} parent=19 // pred_check_branch
          %217 = sbr.rel (%p215) target = $region24
        $region23: #{tpu_custom_call.1} parent=19 // pred_region
          %s218 = sand.u32 %s79, 1
          %s219 = scalar_lea.sflag [#allocation6], %s218
          %s220 = sand.u32 %s79, 1
          %s221 = smul.addr %s220, 8
          %s222 = scalar_lea.vmem [#allocation5], %s221
          %s223 = sadd.s32 %s29, %s30
          %p224 = scmp.lt.s32.totalorder %s223, 0
          %s225 = scalar_select %p224, %s223, 0
          %s227 = ssub.s32 128, 128
          %228 = vsyncadd %s219, %s227
          %s229 = smul.addr %s28, 4
          %s230 = sadd.s32 %s225, %s229
          %s231 = smul.addr %s230, 32
          %s232 = scalar_lea.hbm %s1, %s231
          %s233 = sshll.u32 %s222, 4
          %s234 = int_to_ptr.vmem [resolvable:$true] %s233
          %239 = dma.hbm_to_vmem [thread:$0]  %s232, 128, %s234, %s219, 32, 32, 2
        $region24: #{tpu_custom_call.1} parent=19 // pred_fallthru
          _
        // Predicated region
        $region25: #{tpu_custom_call.1} parent=19 // pred_check
          %p240 = pneg %p123
        $region26: #{tpu_custom_call.1} parent=19 // pred_check_branch
          %242 = sbr.rel (%p240) target = $region28
        $region27: #{tpu_custom_call.1} parent=19 // pred_region
          %s243 = sadd.s32 %s29, %s30
          %p244 = scmp.lt.s32.totalorder %s243, 0
          %s245 = scalar_select %p244, %s243, 0
          %p246 = scmp.lt.s32.totalorder %s28, 1
          %s247 = scalar_select %p246, %s28, 1
          %p248 = scmp.lt.s32.totalorder %s245, 0
          %s249 = scalar_select %p248, %s245, 0
          %s250 = sadd.s32 %s249, %s247
          %s251 = smul.addr %s250, 2
          %s252 = scalar_lea.vmem %s2, %s251
          %s253 = sadd.s32 %s29, %s30
          %p254 = scmp.lt.s32.totalorder %s253, 0
          %s255 = scalar_select %p254, %s253, 0
        $region28: #{tpu_custom_call.1} parent=19 // pred_fallthru
          _
      $region20: #{tpu_custom_call.1} parent=5 // pred_fallthru
        _
      %p256 = scmp.le.s32.totalorder 1, %s21
      %p257 = scmp.lt.s32.totalorder %s21, 3
      %p258 = pnand %p256, %p257
      %p259 = pneg %p258
      // Predicated region
      $region29: #{tpu_custom_call.1} parent=5 // pred_check
        _
      $region30: #{tpu_custom_call.1} parent=5 // pred_check_branch
        %261 = sbr.rel (%p258) target = $region32
      $region31: #{tpu_custom_call.1} parent=5 // pred_region
        %s262 = ssub.s32 %s21, 1
        // Predicated region
        $region33: #{tpu_custom_call.1} parent=31 // pred_check
          %p263 = pneg %p61
        $region34: #{tpu_custom_call.1} parent=31 // pred_check_branch
          %265 = sbr.rel (%p263) target = $region36
        $region35: #{tpu_custom_call.1} parent=31 // pred_region
          %266 = dma.done [#allocation3], 64
        $region36: #{tpu_custom_call.1} parent=31 // pred_fallthru
          _
        %s267 = sand.u32 %s82, 1
        %s268 = scalar_lea.sflag [#allocation6], %s267
        %s269 = sand.u32 %s82, 1
        %s270 = smul.addr %s269, 8
        %s271 = scalar_lea.vmem [#allocation5], %s270
        // Predicated region
        $region37: #{tpu_custom_call.1} parent=31 // pred_check
          %p272 = pneg %p95
        $region38: #{tpu_custom_call.1} parent=31 // pred_check_branch
          %274 = sbr.rel (%p272) target = $region40
        $region39: #{tpu_custom_call.1} parent=31 // pred_region
          %275 = dma.done %s268, 128
        $region40: #{tpu_custom_call.1} parent=31 // pred_fallthru
          _
        %p276 = pneg %p61
        %p277 = pneg %p58
        %s278 = sand.u32 %s82, 1
        %s279 = scalar_lea.sflag [#allocation6], %s278
        %s280 = sand.u32 %s82, 1
        %s281 = smul.addr %s280, 8
        %s282 = scalar_lea.vmem [#allocation5], %s281
        %p283 = pneg %p95
        %p284 = pneg %p92
        %s285 = sadd.s32 %s32, %s33
        %p286 = scmp.lt.s32.totalorder %s285, 0
        %s287 = scalar_select %p286, %s285, 0
        %p288 = scmp.lt.s32.totalorder %s31, 1
        %s289 = scalar_select %p288, %s31, 1
        %p290 = scmp.lt.s32.totalorder %s287, 0
        %s291 = scalar_select %p290, %s287, 0
        %s292 = sadd.s32 %s291, %s289
        %s293 = smul.addr %s292, 2
        %s294 = scalar_lea.vmem %s2, %s293
        %p295 = pneg %p129
        %p296 = pneg %p126
        %p297 = pneg %p157
        %p298 = pneg %p154
        %s299 = sand.u32 %s144, 1
        %s300 = scalar_lea.sflag [#allocation4], %s299
        %s301 = sand.u32 %s144, 1
        %s302 = smul.addr %s301, 2
        %s303 = scalar_lea.vmem [#allocation7], %s302
        %p304 = pneg %p185
        %p305 = pneg %p182
        %s306 = sand.u32 %s172, 1
        %s307 = scalar_lea.sflag [#allocation9], %s306
        %s308 = sand.u32 %s172, 1
        %s309 = smul.addr %s308, 2
        %s310 = scalar_lea.vmem [#allocation8], %s309
        %s311 = sadd.s32 %s32, %s33
        %p312 = scmp.lt.s32.totalorder %s311, 0
        %s313 = scalar_select %p312, %s311, 0
        %s314 = sadd.s32 %s32, %s33
        %p315 = scmp.lt.s32.totalorder %s314, 0
        %s316 = scalar_select %p315, %s314, 0
        %p317 = scmp.lt.s32.totalorder %s31, 1
        %s318 = scalar_select %p317, %s31, 1
        %p319 = scmp.lt.s32.totalorder %s316, 0
        %s320 = scalar_select %p319, %s316, 0
        %s321 = sadd.s32 %s320, %s318
        %s322 = smul.addr %s321, 2
        %s323 = scalar_lea.vmem %s2, %s322
        %s324 = sadd.s32 %s32, %s33
        %p325 = scmp.lt.s32.totalorder %s324, 0
        %s326 = scalar_select %p325, %s324, 0
        %p327 = scmp.eq.s32.totalorder %s33, 0
        // Predicated region
        $region41: #{tpu_custom_call.1} parent=31 // pred_check
          %p328 = pneg %p327
        $region42: #{tpu_custom_call.1} parent=31 // pred_check_branch
          %330 = sbr.rel (%p328) target = $region44
        $region43: #{tpu_custom_call.1} parent=31 // pred_region
          %331 = vst [vmem:[%s303] sm:$0x3] 0.0
          %332 = vst [vmem:[%s310] sm:$0x3] 0.0
        $region44: #{tpu_custom_call.1} parent=31 // pred_fallthru
          _
        %v333 = vld [vmem:[%s271] sm:$0x3]
        %v334 = vld [vmem:[%s271 + $0x2] sm:$0x3]
        %v335 = vld [vmem:[%s271 + $0x4] sm:$0x3]
        %v336 = vld [vmem:[%s271 + $0x6] sm:$0x3]
        %v337 = vld [vmem:[%s323] sm:$0x3]
        %vm338 = vcmask 1041408
        %v339 = vsel %vm338, %v333, -inf
        %v340 = vsel %vm338, %v334, -inf
        %v341 = vsel %vm338, %v335, -inf
        %v342 = vsel %vm338, %v336, -inf
        %v343 = vmax.f32 %v339, %v340
        %v344 = vmax.f32 %v341, %v342
        %v345 = vmax.f32 %v343, %v344
        %v346 = vsub.f32 %v333, %v345
        %v347 = vsub.f32 %v334, %v345
        %v348 = vsub.f32 %v335, %v345
        %v349 = vsub.f32 %v336, %v345
        %v350 = vmul.f32 %v346, 1.442695
        %v351 = vpow.pop %v350
        %v352 = vmul.f32 %v347, 1.442695
        %v353 = vpow.pop %v352
        %v354 = vmul.f32 %v348, 1.442695
        %v355 = vpow.pop %v354
        %v356 = vmul.f32 %v349, 1.442695
        %v357 = vpow.pop %v356
        %v358 = vsel %vm338, %v351, 0.0
        %v359 = vsel %vm338, %v353, 0.0
        %v360 = vadd.f32 %v358, %v359
        %v361 = vsel %vm338, %v355, 0.0
        %v362 = vadd.f32 %v360, %v361
        %v363 = vsel %vm338, %v357, 0.0
        %v364 = vadd.f32 %v362, %v363
        %v365 = vld [vmem:[#allocation2] sm:$0xf]
        %vm366 = vcmp.eq.s32.totalorder %v337, 0
        %v367 = vsel %vm366, %v333, 0.0
        %v368 = vlaneseq
        %v369 = vshrl.u32 %v368, 7
        %v370 = vsub.s32 0, %v369
        %v371 = vrot.slane %v365, %v370
        %v372 = vsel %vm366, %v371, 0.0
        %vm373 = vcmp.eq.s32.totalorder %v337, 1
        %v374 = vsel %vm373, %v334, %v367
        %v375 = vlaneseq
        %v376 = vshrl.u32 %v375, 7
        %v377 = vsub.s32 1, %v376
        %v378 = vrot.slane %v365, %v377
        %v379 = vsel %vm373, %v378, %v372
        %vm380 = vcmp.eq.s32.totalorder %v337, 2
        %v381 = vsel %vm380, %v335, %v374
        %v382 = vlaneseq
        %v383 = vshrl.u32 %v382, 7
        %v384 = vsub.s32 2, %v383
        %v385 = vrot.slane %v365, %v384
        %v386 = vsel %vm380, %v385, %v379
        %vm387 = vcmp.eq.s32.totalorder %v337, 3
        %v388 = vsel %vm387, %v336, %v381
        %v389 = vlaneseq
        %v390 = vshrl.u32 %v389, 7
        %v391 = vsub.s32 3, %v390
        %v392 = vrot.slane %v365, %v391
        %v393 = vsel %vm387, %v392, %v386
        %v394 = vsub.f32 %v388, %v345
        %v395 = vlog2.pop %v364
        %v396 = vmul.f32 %v395, 0.6931472
        %v397 = vsub.f32 %v394, %v396
        %v398 = vmul.f32 %v397, 1.442695
        %v399 = vpow.pop %v398
        %v400 = vsub.f32 1.0, %v399
        %v401 = vmul.f32 %v400, %v400
        %v402 = vsub.f32 0.0, %v401
        %v403 = vmul.f32 %v402, %v397
        %v404 = vld [vmem:[%s303] sm:$0x3]
        %v405 = vadd.f32 %v404, %v403
        %406 = vst [vmem:[%s303] sm:$0x3] %v405
        %v407 = vld [vmem:[%s310] sm:$0x3]
        %v408 = vadd.f32 %v407, %v393
        %409 = vst [vmem:[%s310] sm:$0x3] %v408
        %s410 = sand.u32 %s144, 1
        %s411 = scalar_lea.sflag [#allocation4], %s410
        %s412 = sand.u32 %s144, 1
        %s413 = smul.addr %s412, 2
        %s414 = scalar_lea.vmem [#allocation7], %s413
        %s415 = sand.u32 %s172, 1
        %s416 = scalar_lea.sflag [#allocation9], %s415
        %s417 = sand.u32 %s172, 1
        %s418 = smul.addr %s417, 2
        %s419 = scalar_lea.vmem [#allocation8], %s418
        // Predicated region
        $region45: #{tpu_custom_call.1} parent=31 // pred_check
          %p420 = pneg %p154
        $region46: #{tpu_custom_call.1} parent=31 // pred_check_branch
          %422 = sbr.rel (%p420) target = $region48
        $region47: #{tpu_custom_call.1} parent=31 // pred_region
          %s424 = ssub.s32 32, 32
          %425 = vsyncadd %s411, %s424
          %s426 = sadd.s32 %s32, %s31
          %s427 = smul.addr %s426, 32
          %s428 = scalar_lea.hbm %s3, %s427
          %s430 = sshll.u32 %s414, 4
          %s431 = int_to_ptr.vmem [resolvable:$true] %s430
          %433 = dma.vmem_to_hbm [thread:$0]  %s431, 32, %s428, %s411
        $region48: #{tpu_custom_call.1} parent=31 // pred_fallthru
          _
        // Predicated region
        $region49: #{tpu_custom_call.1} parent=31 // pred_check
          %p434 = pneg %p182
        $region50: #{tpu_custom_call.1} parent=31 // pred_check_branch
          %436 = sbr.rel (%p434) target = $region52
        $region51: #{tpu_custom_call.1} parent=31 // pred_region
          %s438 = ssub.s32 32, 32
          %439 = vsyncadd %s416, %s438
          %s440 = sadd.s32 %s32, %s31
          %s441 = smul.addr %s440, 32
          %s442 = scalar_lea.hbm %s4, %s441
          %s444 = sshll.u32 %s419, 4
          %s445 = int_to_ptr.vmem [resolvable:$true] %s444
          %447 = dma.vmem_to_hbm [thread:$0]  %s445, 32, %s442, %s416
        $region52: #{tpu_custom_call.1} parent=31 // pred_fallthru
          _
      $region32: #{tpu_custom_call.1} parent=5 // pred_fallthru
        _
      %p448 = scmp.le.s32.totalorder 2, %s21
      // Predicated region
      $region53: #{tpu_custom_call.1} parent=5 // pred_check
        %p449 = pneg %p448
      $region54: #{tpu_custom_call.1} parent=5 // pred_check_branch
        %451 = sbr.rel (%p449) target = $region56
      $region55: #{tpu_custom_call.1} parent=5 // pred_region
        %s452 = ssub.s32 %s21, 2
        // Predicated region
        $region57: #{tpu_custom_call.1} parent=55 // pred_check
          %p453 = pneg %p160
        $region58: #{tpu_custom_call.1} parent=55 // pred_check_branch
          %455 = sbr.rel (%p453) target = $region60
        $region59: #{tpu_custom_call.1} parent=55 // pred_region
          %s456 = sand.u32 %s145, 1
          %s457 = scalar_lea.sflag [#allocation4], %s456
          %s458 = sand.u32 %s145, 1
          %s459 = smul.addr %s458, 2
          %s460 = scalar_lea.vmem [#allocation7], %s459
          %461 = dma.done %s457, 32
        $region60: #{tpu_custom_call.1} parent=55 // pred_fallthru
          _
        // Predicated region
        $region61: #{tpu_custom_call.1} parent=55 // pred_check
          %p462 = pneg %p188
        $region62: #{tpu_custom_call.1} parent=55 // pred_check_branch
          %464 = sbr.rel (%p462) target = $region64
        $region63: #{tpu_custom_call.1} parent=55 // pred_region
          %s465 = sand.u32 %s173, 1
          %s466 = scalar_lea.sflag [#allocation9], %s465
          %s467 = sand.u32 %s173, 1
          %s468 = smul.addr %s467, 2
          %s469 = scalar_lea.vmem [#allocation8], %s468
          %470 = dma.done %s466, 32
        $region64: #{tpu_custom_call.1} parent=55 // pred_fallthru
          _
      $region56: #{tpu_custom_call.1} parent=5 // pred_fallthru
        _
    $region6: #{tpu_custom_call.1} parent=1 // loop_footer
      %s25 = sadd.s32 1, %s21
    $region7: #{tpu_custom_call.1} parent=1 // loop_footer_branch
      %20 = sbr.rel target = $region3
    $region8: #{tpu_custom_call.1} parent=1 // loop_exit
      _
    %471 = vsyncpa [#allocation3], 1
    %s472 = scalar_lea.sflag [#allocation3], 1
    %473 = vsyncpa %s472, 1
    %474 = vsyncpa [#allocation6], 1
    %s475 = scalar_lea.sflag [#allocation6], 1
    %476 = vsyncpa %s475, 1
    %477 = vsyncpa [#allocation4], 1
    %s478 = scalar_lea.sflag [#allocation4], 1
    %479 = vsyncpa %s478, 1
    %480 = vsyncpa [#allocation9], 1
    %s481 = scalar_lea.sflag [#allocation9], 1
    %482 = vsyncpa %s481, 1

</llo_original>
